<compile_context>
chip_gen: v7x
topology: tpu7x:2x2x1
jax: 0.10.0
libtpu: 0.0.40
codegen_flags: <defaults>
</compile_context>

<pallas_src>
import functools
import math

import jax
import jax.numpy as jnp
from jax.experimental import pallas as pl
from jax.experimental.pallas import tpu as pltpu


# ---------------------------------------------------------------------------
# Stage 1: fused QKV projection kernel
# ---------------------------------------------------------------------------
def qkv_proj_kernel(x_ref, w_ref, q_ref, k_ref, v_ref, *, head_size):
    # x_ref: (tm, C)   w_ref: (C, 3H)   q/k/v_ref: (tm, H)
    # The q column block of w already carries the 1/sqrt(H) scale.
    qkv = jnp.dot(x_ref[...], w_ref[...], preferred_element_type=jnp.float32)
    h = head_size
    q_ref[...] = qkv[:, :h].astype(q_ref.dtype)
    k_ref[...] = qkv[:, h:2 * h].astype(k_ref.dtype)
    v_ref[...] = qkv[:, 2 * h:].astype(v_ref.dtype)


# ---------------------------------------------------------------------------
# Stage 2: flash-attention kernel (online softmax, causal tile skipping)
# ---------------------------------------------------------------------------
def flash_attn_kernel(q_ref, k_ref, v_ref, o_ref, m_sc, l_sc, acc_sc, *, tq, tk):
    # q_ref: (1, tq, H)  k_ref/v_ref: (1, tk, H)  o_ref: (1, tq, H)
    # m_sc/l_sc: (tq, 1) f32   acc_sc: (tq, H) f32
    qi = pl.program_id(1)
    ki = pl.program_id(2)
    nk = pl.num_programs(2)

    q_start = qi * tq
    kv_start = ki * tk
    # Tile has at least one unmasked (col <= row) entry:
    is_active = kv_start <= q_start + tq - 1
    # Tile straddles the diagonal (some col > row), i.e. needs the iota mask:
    crosses = kv_start + tk - 1 > q_start

    @pl.when(ki == 0)
    def _():
        m_sc[...] = jnp.full_like(m_sc, -jnp.inf)
        l_sc[...] = jnp.zeros_like(l_sc)
        acc_sc[...] = jnp.zeros_like(acc_sc)

    def process(apply_mask):
        q = q_ref[0]          # (tq, H), already scaled by 1/sqrt(H)
        k = k_ref[0]          # (tk, H)
        v = v_ref[0]          # (tk, H)
        # QK^T contracting the last dim of both operands (no explicit k.T).
        s = jax.lax.dot_general(
            q, k, (((1,), (1,)), ((), ())),
            preferred_element_type=jnp.float32)        # (tq, tk)
        if apply_mask:
            row = jax.lax.broadcasted_iota(jnp.int32, (tq, tk), 0) + q_start
            col = jax.lax.broadcasted_iota(jnp.int32, (tq, tk), 1) + kv_start
            s = jnp.where(col <= row, s, -jnp.inf)
        m_prev = m_sc[...]
        m_new = jnp.maximum(m_prev, jnp.max(s, axis=-1, keepdims=True))
        alpha = jnp.exp(m_prev - m_new)
        p = jnp.exp(s - m_new)                          # (tq, tk)
        l_sc[...] = alpha * l_sc[...] + jnp.sum(p, axis=-1, keepdims=True)
        acc_sc[...] = alpha * acc_sc[...] + jnp.dot(
            p.astype(v.dtype), v, preferred_element_type=jnp.float32)
        m_sc[...] = m_new

    # Diagonal-crossing (and not fully masked) tiles: apply the causal mask.
    @pl.when(jnp.logical_and(is_active, crosses))
    def _():
        process(apply_mask=True)

    # Fully-below-diagonal tiles: no mask work at all.
    @pl.when(jnp.logical_not(crosses))
    def _():
        process(apply_mask=False)

    # Fully-masked (above-diagonal) tiles fall through: no compute, and the
    # k/v index_map clamps to the previous block so no DMA is issued either.

    @pl.when(ki == nk - 1)
    def _():
        o_ref[0] = (acc_sc[...] * pl.reciprocal(l_sc[...], approx=True)
                    ).astype(o_ref.dtype)


# ---------------------------------------------------------------------------
# Wrapper
# ---------------------------------------------------------------------------
def _choose_tile(n, target):
    """Largest tile <= target that evenly divides n (multiple of 8 if tiling)."""
    if n <= target:
        return n
    for cand in range(target, 7, -1):
        if cand % 8 == 0 and n % cand == 0:
            return cand
    return n  # no clean divisor: fall back to a single whole-axis block


def head_forward(x, wk, wq, wv, *, seq_tile=None, m_tile=None):
    """x: (B, T, C) f32; wk/wq/wv: (C, H) f32 -> (B, T, H)."""
    B, T, C = x.shape
    H = wk.shape[1]
    scale = 1.0 / math.sqrt(H)

    # ---- Stage 1: fused QKV projection over flattened (B*T, C) rows ----
    M = B * T
    tm = m_tile if m_tile is not None else _choose_tile(M, 256)
    assert M % tm == 0, "m_tile must divide B*T"
    x2d = x.reshape(M, C)
    # Fold the 1/sqrt(H) attention scale into the (tiny) q weight once, so the
    # kernels never touch it.  q | k | v concatenated -> (C, 3H).
    wqkv = jnp.concatenate([wq * scale, wk, wv], axis=1)

    q2d, k2d, v2d = pl.pallas_call(
        functools.partial(qkv_proj_kernel, head_size=H),
        out_shape=(
            jax.ShapeDtypeStruct((M, H), x.dtype),
            jax.ShapeDtypeStruct((M, H), x.dtype),
            jax.ShapeDtypeStruct((M, H), x.dtype),
        ),
        grid_spec=pltpu.PrefetchScalarGridSpec(
            num_scalar_prefetch=0,
            grid=(M // tm,),
            in_specs=[
                pl.BlockSpec((tm, C), lambda i: (i, 0)),
                pl.BlockSpec((C, 3 * H), lambda i: (0, 0)),
            ],
            out_specs=[
                pl.BlockSpec((tm, H), lambda i: (i, 0)),
                pl.BlockSpec((tm, H), lambda i: (i, 0)),
                pl.BlockSpec((tm, H), lambda i: (i, 0)),
            ],
        ),
        compiler_params=pltpu.CompilerParams(
            dimension_semantics=("parallel",)),
    )(x2d, wqkv)

    q = q2d.reshape(B, T, H)
    k = k2d.reshape(B, T, H)
    v = v2d.reshape(B, T, H)

    # ---- Stage 2: flash attention with causal masking ----
    t = seq_tile if seq_tile is not None else _choose_tile(T, 128)
    assert T % t == 0, "seq_tile must divide T"
    nt = T // t

    # For fully-masked (above-diagonal) kv tiles the kernel does no work; clamp
    # their k/v block index to the diagonal tile so Pallas sees an unchanged
    # block index and skips the DMA entirely.
    def kv_index_map(b, qi, ki):
        return (b, jnp.minimum(ki, qi), 0)

    return pl.pallas_call(
        functools.partial(flash_attn_kernel, tq=t, tk=t),
        out_shape=jax.ShapeDtypeStruct((B, T, H), x.dtype),
        grid_spec=pltpu.PrefetchScalarGridSpec(
            num_scalar_prefetch=0,
            grid=(B, nt, nt),
            in_specs=[
                pl.BlockSpec((1, t, H), lambda b, qi, ki: (b, qi, 0)),
                pl.BlockSpec((1, t, H), kv_index_map),
                pl.BlockSpec((1, t, H), kv_index_map),
            ],
            out_specs=pl.BlockSpec((1, t, H), lambda b, qi, ki: (b, qi, 0)),
            scratch_shapes=[
                pltpu.VMEM((t, 1), jnp.float32),   # running max  m
                pltpu.VMEM((t, 1), jnp.float32),   # running sum  l
                pltpu.VMEM((t, H), jnp.float32),   # running output accumulator
            ],
        ),
        compiler_params=pltpu.CompilerParams(
            dimension_semantics=("parallel", "parallel", "arbitrary")),
    )(q, k, v)


def head_reference(x, wk, wq, wv):
    """Plain-JAX reference mirroring the PyTorch forward (eval mode)."""
    H = wk.shape[1]
    k = x @ wk
    q = x @ wq
    v = x @ wv
    wei = (q @ jnp.swapaxes(k, -2, -1)) * (H ** -0.5)
    T = x.shape[1]
    tril = jnp.tril(jnp.ones((T, T), dtype=bool))
    wei = jnp.where(tril, wei, -jnp.inf)
    wei = jax.nn.softmax(wei, axis=-1)
    return wei @ v


if __name__ == "__main__":
    # Small config: head_size=32, n_heads=4 -> n_embd=128, seq len 32.
    B, T, C, H = 2, 32, 128, 32

    key = jax.random.PRNGKey(0)
    kx, kk, kq, kv = jax.random.split(key, 4)

    x = jax.random.normal(kx, (B, T, C), dtype=jnp.float32)
    bound = 1.0 / math.sqrt(C)
    wk = jax.random.uniform(kk, (C, H), minval=-bound, maxval=bound, dtype=jnp.float32)
    wq = jax.random.uniform(kq, (C, H), minval=-bound, maxval=bound, dtype=jnp.float32)
    wv = jax.random.uniform(kv, (C, H), minval=-bound, maxval=bound, dtype=jnp.float32)

    # seq_tile=8 forces multiple q/kv tiles so the online-softmax accumulation,
    # causal tile-skipping and DMA-clamping paths are exercised at this small T.
    out = head_forward(x, wk, wq, wv, seq_tile=8)
    out = jax.block_until_ready(out)

    ref = head_reference(x, wk, wq, wv)
    assert out.shape == (B, T, H)
    max_err = float(jnp.max(jnp.abs(out - ref)))
    assert jnp.allclose(out, ref, atol=2e-3, rtol=2e-3), (
        f"mismatch vs reference: max abs err {max_err}")

    print("KERNEL_OK")
</pallas_src>

<mosaic_0001>
module attributes {stable_mosaic.version = 11 : i64} {
  func.func @qkv_proj_kernel(%arg0: i32, %arg1: memref<64x128xf32, #tpu.memory_space<vmem>>, %arg2: memref<128x96xf32, #tpu.memory_space<vmem>>, %arg3: memref<64x32xf32, #tpu.memory_space<vmem>>, %arg4: memref<64x32xf32, #tpu.memory_space<vmem>>, %arg5: memref<64x32xf32, #tpu.memory_space<vmem>>) attributes {dimension_semantics = [#tpu.dimension_semantics<parallel>], iteration_bounds = array<i64: 1>, scalar_prefetch = 0 : i64, scratch_operands = 0 : i64, tpu.core_type = #tpu.core_type<tc>, window_params = [{transform_indices = @transform_0, window_bounds = array<i64: 64, 128>}, {pipeline_mode = #tpu.pipeline_mode<synchronous>, transform_indices = @transform_1, window_bounds = array<i64: 128, 96>}, {transform_indices = @transform_2, window_bounds = array<i64: 64, 32>}, {transform_indices = @transform_3, window_bounds = array<i64: 64, 32>}, {transform_indices = @transform_4, window_bounds = array<i64: 64, 32>}]} {
    %c0 = arith.constant 0 : index
    %c0_0 = arith.constant 0 : index
    %0 = vector.load %arg1[%c0, %c0_0] : memref<64x128xf32, #tpu.memory_space<vmem>>, vector<64x128xf32>
    %c0_1 = arith.constant 0 : index
    %c0_2 = arith.constant 0 : index
    %1 = vector.load %arg2[%c0_1, %c0_2] : memref<128x96xf32, #tpu.memory_space<vmem>>, vector<128x96xf32>
    %cst = arith.constant dense<0.000000e+00> : vector<64x96xf32>
    %2 = tpu.matmul %0, %1, %cst {dimension_numbers = #tpu.dot_dimension_numbers<[1], [0], [0], [1], [0, 0, 1, 1], [], []>} : vector<64x128xf32>, vector<128x96xf32>, vector<64x96xf32> -> vector<64x96xf32>
    %3 = vector.extract_strided_slice %2 {offsets = [0, 0], sizes = [64, 32], strides = [1, 1]} : vector<64x96xf32> to vector<64x32xf32>
    %c0_3 = arith.constant 0 : index
    %c0_4 = arith.constant 0 : index
    %4 = vector.load %arg3[%c0_3, %c0_4] : memref<64x32xf32, #tpu.memory_space<vmem>>, vector<64x32xf32>
    tpu.vector_store %arg3[%c0_3, %c0_4], %3 {strides = array<i32>} : memref<64x32xf32, #tpu.memory_space<vmem>>, vector<64x32xf32>,
    %5 = vector.extract_strided_slice %2 {offsets = [0, 32], sizes = [64, 32], strides = [1, 1]} : vector<64x96xf32> to vector<64x32xf32>
    %c0_5 = arith.constant 0 : index
    %c0_6 = arith.constant 0 : index
    %6 = vector.load %arg4[%c0_5, %c0_6] : memref<64x32xf32, #tpu.memory_space<vmem>>, vector<64x32xf32>
    tpu.vector_store %arg4[%c0_5, %c0_6], %5 {strides = array<i32>} : memref<64x32xf32, #tpu.memory_space<vmem>>, vector<64x32xf32>,
    %7 = vector.extract_strided_slice %2 {offsets = [0, 64], sizes = [64, 32], strides = [1, 1]} : vector<64x96xf32> to vector<64x32xf32>
    %c0_7 = arith.constant 0 : index
    %c0_8 = arith.constant 0 : index
    %8 = vector.load %arg5[%c0_7, %c0_8] : memref<64x32xf32, #tpu.memory_space<vmem>>, vector<64x32xf32>
    tpu.vector_store %arg5[%c0_7, %c0_8], %7 {strides = array<i32>} : memref<64x32xf32, #tpu.memory_space<vmem>>, vector<64x32xf32>,
    return
  }
  func.func @transform_0(%arg0: i32) -> (i32, i32) {
    %c0_i32 = arith.constant 0 : i32
    %c0_i32_0 = arith.constant 0 : i32
    return %arg0, %c0_i32 : i32, i32
  }
  func.func @transform_1(%arg0: i32) -> (i32, i32) {
    %c0_i32 = arith.constant 0 : i32
    %c0_i32_0 = arith.constant 0 : i32
    %c0_i32_1 = arith.constant 0 : i32
    return %c0_i32, %c0_i32_0 : i32, i32
  }
  func.func @transform_2(%arg0: i32) -> (i32, i32) {
    %c0_i32 = arith.constant 0 : i32
    %c0_i32_0 = arith.constant 0 : i32
    return %arg0, %c0_i32 : i32, i32
  }
  func.func @transform_3(%arg0: i32) -> (i32, i32) {
    %c0_i32 = arith.constant 0 : i32
    %c0_i32_0 = arith.constant 0 : i32
    return %arg0, %c0_i32 : i32, i32
  }
  func.func @transform_4(%arg0: i32) -> (i32, i32) {
    %c0_i32 = arith.constant 0 : i32
    %c0_i32_0 = arith.constant 0 : i32
    return %arg0, %c0_i32 : i32, i32
  }
}

</mosaic_0001>

<llo_original>
// kernel: tpu_custom_call.1
$region0: #{tpu_custom_call.1}
  #allocation0 [shape = 'u32[]', space=smem, size = 0x4, offset = 0x4, fixed_abs, tag = 'smem constant byte address 0x4 - core index']
  #allocation1 [shape = 'u32[144,128]{1,0:T(1,128)}', space=vmem, size = 0x12000, scoped, tag = 'internal scratch']
  %s0 = inlined_call_operand.vmem [shape: f32[64,128], index: 0, kind: input, shape index: {}]
  %s1 = inlined_call_operand.vmem [shape: f32[128,96], index: 1, kind: input, shape index: {}]
  %s2 = inlined_call_operand.vmem [shape: f32[64,32], index: 2, kind: output, shape index: {0}]
  %s3 = inlined_call_operand.vmem [shape: f32[64,32], index: 3, kind: output, shape index: {1}]
  %s4 = inlined_call_operand.vmem [shape: f32[64,32], index: 4, kind: output, shape index: {2}]
  %5 = xla_tuple %s2, %s3, %s4
  %s6 = sld [smem:[#allocation0]]
  $region34: #{tpu_custom_call.1} parent=0
    _
  %s8 = ssub.s32 1, %s6
  %s9 = scalar_select 0, %s8, %s6
  // Predicated region
  $region2: #{tpu_custom_call.1} parent=0 // pred_check
    _
  $region3: #{tpu_custom_call.1} parent=0 // pred_check_branch
    %11 = sbr.rel (0) target = $region5
  $region4: #{tpu_custom_call.1} parent=0 // pred_region
    _
  $region5: #{tpu_custom_call.1} parent=0 // pred_fallthru
    _
  // Predicated region
  $region6: #{tpu_custom_call.1} parent=0 // pred_check
    _
  $region7: #{tpu_custom_call.1} parent=0 // pred_check_branch
    %13 = sbr.rel (0) target = $region9
  $region8: #{tpu_custom_call.1} parent=0 // pred_region
    _
  $region9: #{tpu_custom_call.1} parent=0 // pred_fallthru
    _
  %v14 = vld [vmem:[%s0] sm:$0xff]
  %v15 = vld [vmem:[%s0 + $0x8] sm:$0xff]
  %v16 = vld [vmem:[%s0 + $0x10] sm:$0xff]
  %v17 = vld [vmem:[%s0 + $0x18] sm:$0xff]
  %v18 = vld [vmem:[%s0 + $0x20] sm:$0xff]
  %v19 = vld [vmem:[%s0 + $0x28] sm:$0xff]
  %v20 = vld [vmem:[%s0 + $0x30] sm:$0xff]
  %v21 = vld [vmem:[%s0 + $0x38] sm:$0xff]
  %v22 = vld [vmem:[%s1] sm:$0xff]
  %v23 = vld [vmem:[%s1 + $0x8] sm:$0xff]
  %v24 = vld [vmem:[%s1 + $0x10] sm:$0xff]
  %v25 = vld [vmem:[%s1 + $0x18] sm:$0xff]
  %v26 = vld [vmem:[%s1 + $0x20] sm:$0xff]
  %v27 = vld [vmem:[%s1 + $0x28] sm:$0xff]
  %v28 = vld [vmem:[%s1 + $0x30] sm:$0xff]
  %v29 = vld [vmem:[%s1 + $0x38] sm:$0xff]
  %v30 = vld [vmem:[%s1 + $0x40] sm:$0xff]
  %v31 = vld [vmem:[%s1 + $0x48] sm:$0xff]
  %v32 = vld [vmem:[%s1 + $0x50] sm:$0xff]
  %v33 = vld [vmem:[%s1 + $0x58] sm:$0xff]
  %v34 = vld [vmem:[%s1 + $0x60] sm:$0xff]
  %v35 = vld [vmem:[%s1 + $0x68] sm:$0xff]
  %v36 = vld [vmem:[%s1 + $0x70] sm:$0xff]
  %v37 = vld [vmem:[%s1 + $0x78] sm:$0xff]
  %38 = vmatprep.subr.mxu0 0.0
  %39 = vmatpush1.msra.mxu0 %v22
  %40 = vmatprep.subr.mxu0 0.0
  %41 = vmatpush1.msra.mxu0 %v23
  %42 = vmatprep.subr.mxu0 0.0
  %43 = vmatpush1.msra.mxu0 %v24
  %44 = vmatprep.subr.mxu0 0.0
  %45 = vmatpush1.msra.mxu0 %v25
  %46 = vmatprep.subr.mxu0 0.0
  %47 = vmatpush1.msra.mxu0 %v26
  %48 = vmatprep.subr.mxu0 0.0
  %49 = vmatpush1.msra.mxu0 %v27
  %50 = vmatprep.subr.mxu0 0.0
  %51 = vmatpush1.msra.mxu0 %v28
  %52 = vmatprep.subr.mxu0 0.0
  %53 = vmatpush1.msra.mxu0 %v29
  %54 = vmatprep.subr.mxu0 0.0
  %55 = vmatpush1.msra.mxu0 %v30
  %56 = vmatprep.subr.mxu0 0.0
  %57 = vmatpush1.msra.mxu0 %v31
  %58 = vmatprep.subr.mxu0 0.0
  %59 = vmatpush1.msra.mxu0 %v32
  %60 = vmatprep.subr.mxu0 0.0
  %61 = vmatpush1.msra.mxu0 %v33
  %62 = vmatprep.subr.mxu0 0.0
  %63 = vmatpush1.msra.mxu0 %v34
  %64 = vmatprep.subr.mxu0 0.0
  %65 = vmatpush1.msra.mxu0 %v35
  %66 = vmatprep.subr.mxu0 0.0
  %67 = vmatpush1.msra.mxu0 %v36
  %68 = vmatprep.subr.mxu0 0.0
  %69 = vmatpush1.msra.mxu0 %v37
  %70 = vmatprep.subr.mxu0 0.0
  %71 = vmatpush1.msra.mxu0 0.0
  %72 = vmatprep.subr.mxu0 0.0
  %73 = vmatpush1.msra.mxu0 0.0
  %74 = vmatprep.subr.mxu0 0.0
  %75 = vmatpush1.msra.mxu0 0.0
  %76 = vmatprep.subr.mxu0 0.0
  %77 = vmatpush1.msra.mxu0 0.0
  %78 = vmatprep.subr.mxu0 0.0
  %79 = vmatpush1.msra.mxu0 0.0
  %80 = vmatprep.subr.mxu0 0.0
  %81 = vmatpush1.msra.mxu0 0.0
  %82 = vmatprep.subr.mxu0 0.0
  %83 = vmatpush1.msra.mxu0 0.0
  %84 = vmatprep.subr.mxu0 0.0
  %85 = vmatpush1.msra.mxu0 0.0
  %86 = vmatprep.subr.mxu0 0.0
  %87 = vmatpush1.msra.mxu0 0.0
  %88 = vmatprep.subr.mxu0 0.0
  %89 = vmatpush1.msra.mxu0 0.0
  %90 = vmatprep.subr.mxu0 0.0
  %91 = vmatpush1.msra.mxu0 0.0
  %92 = vmatprep.subr.mxu0 0.0
  %93 = vmatpush1.msra.mxu0 0.0
  %94 = vmatprep.subr.mxu0 0.0
  %95 = vmatpush1.msra.mxu0 0.0
  %96 = vmatprep.subr.mxu0 0.0
  %97 = vmatpush1.msra.mxu0 0.0
  %98 = vmatprep.subr.mxu0 0.0
  %99 = vmatpush1.msra.mxu0 0.0
  %100 = vmatprep.subr.mxu0 0.0
  %101 = vmatpush1.msra.mxu0 0.0
  %102 = vmatprep.mubr.f32.mxu0 0.0
  %103 = vmatmul.mubr.f32.gmra.mrb[0].mxu0 %v14
  %v104 = vpop.f32.mrb[0].mxu0
  %v105 = vadd.f32 0.0, %v104
  %v106 = vpop.f32.mrb[0].mxu0
  %107 = vmatprep.mubr.f32.mxu0 0.0
  %108 = vmatmul.mubr.f32.gmra.mrb[0].mxu0 %v15
  %v109 = vpop.f32.mrb[0].mxu0
  %v110 = vadd.f32 0.0, %v109
  %v111 = vpop.f32.mrb[0].mxu0
  %112 = vmatprep.mubr.f32.mxu0 0.0
  %113 = vmatmul.mubr.f32.gmra.mrb[0].mxu0 %v16
  %v114 = vpop.f32.mrb[0].mxu0
  %v115 = vadd.f32 0.0, %v114
  %v116 = vpop.f32.mrb[0].mxu0
  %117 = vmatprep.mubr.f32.mxu0 0.0
  %118 = vmatmul.mubr.f32.gmra.mrb[0].mxu0 %v17
  %v119 = vpop.f32.mrb[0].mxu0
  %v120 = vadd.f32 0.0, %v119
  %v121 = vpop.f32.mrb[0].mxu0
  %122 = vmatprep.mubr.f32.mxu0 0.0
  %123 = vmatmul.mubr.f32.gmra.mrb[0].mxu0 %v18
  %v124 = vpop.f32.mrb[0].mxu0
  %v125 = vadd.f32 0.0, %v124
  %v126 = vpop.f32.mrb[0].mxu0
  %127 = vmatprep.mubr.f32.mxu0 0.0
  %128 = vmatmul.mubr.f32.gmra.mrb[0].mxu0 %v19
  %v129 = vpop.f32.mrb[0].mxu0
  %v130 = vadd.f32 0.0, %v129
  %v131 = vpop.f32.mrb[0].mxu0
  %132 = vmatprep.mubr.f32.mxu0 0.0
  %133 = vmatmul.mubr.f32.gmra.mrb[0].mxu0 %v20
  %v134 = vpop.f32.mrb[0].mxu0
  %v135 = vadd.f32 0.0, %v134
  %v136 = vpop.f32.mrb[0].mxu0
  %137 = vmatprep.mubr.f32.mxu0 0.0
  %138 = vmatmul.mubr.f32.gmra.mrb[0].mxu0 %v21
  %v139 = vpop.f32.mrb[0].mxu0
  %v140 = vadd.f32 0.0, %v139
  %v141 = vpop.f32.mrb[0].mxu0
  %142 = vdwg.mxu0
  %vm143 = vcmask 261120
  %144 = vst.msk [vmem:[%s2] sm:$0xff] %vm143, %v105
  %145 = vst.msk [vmem:[%s2 + $0x8] sm:$0xff] %vm143, %v110
  %146 = vst.msk [vmem:[%s2 + $0x10] sm:$0xff] %vm143, %v115
  %147 = vst.msk [vmem:[%s2 + $0x18] sm:$0xff] %vm143, %v120
  %148 = vst.msk [vmem:[%s2 + $0x20] sm:$0xff] %vm143, %v125
  %149 = vst.msk [vmem:[%s2 + $0x28] sm:$0xff] %vm143, %v130
  %150 = vst.msk [vmem:[%s2 + $0x30] sm:$0xff] %vm143, %v135
  %151 = vst.msk [vmem:[%s2 + $0x38] sm:$0xff] %vm143, %v140
  %160 = vrot.lane.b32.xlu0 %v105, 96
  %v161 = vpop.permute.xlu0 %160
  %162 = vrot.lane.b32.xlu0 %v110, 96
  %v163 = vpop.permute.xlu0 %162
  %164 = vrot.lane.b32.xlu0 %v115, 96
  %v165 = vpop.permute.xlu0 %164
  %166 = vrot.lane.b32.xlu0 %v120, 96
  %v167 = vpop.permute.xlu0 %166
  %168 = vrot.lane.b32.xlu0 %v125, 96
  %v169 = vpop.permute.xlu0 %168
  %170 = vrot.lane.b32.xlu0 %v130, 96
  %v171 = vpop.permute.xlu0 %170
  %172 = vrot.lane.b32.xlu0 %v135, 96
  %v173 = vpop.permute.xlu0 %172
  %174 = vrot.lane.b32.xlu0 %v140, 96
  %v175 = vpop.permute.xlu0 %174
  %184 = vst.msk [vmem:[%s3] sm:$0xff] %vm143, %v161
  %185 = vst.msk [vmem:[%s3 + $0x8] sm:$0xff] %vm143, %v163
  %186 = vst.msk [vmem:[%s3 + $0x10] sm:$0xff] %vm143, %v165
  %187 = vst.msk [vmem:[%s3 + $0x18] sm:$0xff] %vm143, %v167
  %188 = vst.msk [vmem:[%s3 + $0x20] sm:$0xff] %vm143, %v169
  %189 = vst.msk [vmem:[%s3 + $0x28] sm:$0xff] %vm143, %v171
  %190 = vst.msk [vmem:[%s3 + $0x30] sm:$0xff] %vm143, %v173
  %191 = vst.msk [vmem:[%s3 + $0x38] sm:$0xff] %vm143, %v175
  %192 = vrot.lane.b32.xlu0 %v105, 64
  %v193 = vpop.permute.xlu0 %192
  %194 = vrot.lane.b32.xlu0 %v110, 64
  %v195 = vpop.permute.xlu0 %194
  %196 = vrot.lane.b32.xlu0 %v115, 64
  %v197 = vpop.permute.xlu0 %196
  %198 = vrot.lane.b32.xlu0 %v120, 64
  %v199 = vpop.permute.xlu0 %198
  %200 = vrot.lane.b32.xlu0 %v125, 64
  %v201 = vpop.permute.xlu0 %200
  %202 = vrot.lane.b32.xlu0 %v130, 64
  %v203 = vpop.permute.xlu0 %202
  %204 = vrot.lane.b32.xlu0 %v135, 64
  %v205 = vpop.permute.xlu0 %204
  %206 = vrot.lane.b32.xlu0 %v140, 64
  %v207 = vpop.permute.xlu0 %206
  %216 = vst.msk [vmem:[%s4] sm:$0xff] %vm143, %v193
  %217 = vst.msk [vmem:[%s4 + $0x8] sm:$0xff] %vm143, %v195
  %218 = vst.msk [vmem:[%s4 + $0x10] sm:$0xff] %vm143, %v197
  %219 = vst.msk [vmem:[%s4 + $0x18] sm:$0xff] %vm143, %v199
  %220 = vst.msk [vmem:[%s4 + $0x20] sm:$0xff] %vm143, %v201
  %221 = vst.msk [vmem:[%s4 + $0x28] sm:$0xff] %vm143, %v203
  %222 = vst.msk [vmem:[%s4 + $0x30] sm:$0xff] %vm143, %v205
  %223 = vst.msk [vmem:[%s4 + $0x38] sm:$0xff] %vm143, %v207
  // Predicated region
  $region10: #{tpu_custom_call.1} parent=0 // pred_check
    _
  $region11: #{tpu_custom_call.1} parent=0 // pred_check_branch
    %225 = sbr.rel (0) target = $region13
  $region12: #{tpu_custom_call.1} parent=0 // pred_region
    _
  $region13: #{tpu_custom_call.1} parent=0 // pred_fallthru
    _
  // Predicated region
  $region14: #{tpu_custom_call.1} parent=0 // pred_check
    _
  $region15: #{tpu_custom_call.1} parent=0 // pred_check_branch
    %227 = sbr.rel (0) target = $region17
  $region16: #{tpu_custom_call.1} parent=0 // pred_region
    _
  $region17: #{tpu_custom_call.1} parent=0 // pred_fallthru
    _
  // Predicated region
  $region18: #{tpu_custom_call.1} parent=0 // pred_check
    _
  $region19: #{tpu_custom_call.1} parent=0 // pred_check_branch
    %229 = sbr.rel (0) target = $region21
  $region20: #{tpu_custom_call.1} parent=0 // pred_region
    _
  $region21: #{tpu_custom_call.1} parent=0 // pred_fallthru
    _
  // Predicated region
  $region22: #{tpu_custom_call.1} parent=0 // pred_check
    _
  $region23: #{tpu_custom_call.1} parent=0 // pred_check_branch
    %231 = sbr.rel (0) target = $region25
  $region24: #{tpu_custom_call.1} parent=0 // pred_region
    _
  $region25: #{tpu_custom_call.1} parent=0 // pred_fallthru
    _
  // Predicated region
  $region26: #{tpu_custom_call.1} parent=0 // pred_check
    _
  $region27: #{tpu_custom_call.1} parent=0 // pred_check_branch
    %233 = sbr.rel (0) target = $region29
  $region28: #{tpu_custom_call.1} parent=0 // pred_region
    _
  $region29: #{tpu_custom_call.1} parent=0 // pred_fallthru
    _
  // Predicated region
  $region30: #{tpu_custom_call.1} parent=0 // pred_check
    _
  $region31: #{tpu_custom_call.1} parent=0 // pred_check_branch
    %235 = sbr.rel (0) target = $region33
  $region32: #{tpu_custom_call.1} parent=0 // pred_region
    _
  $region33: #{tpu_custom_call.1} parent=0 // pred_fallthru
    _

</llo_original>
